<compile_context>
chip_gen: v6e
topology: v6e:2x2x1
jax: 0.10.0
libtpu: 0.0.40
codegen_flags: <defaults>
</compile_context>

<pallas_src>
import math

import jax
import jax.numpy as jnp
from jax.experimental import pallas as pl
from jax.experimental.pallas import tpu as pltpu

_TINY_BYTES = 256 * 1024          # below this, XLA fused add beats kernel launch overhead
_BLOCK_BYTES = 4 * 1024 * 1024    # per-array per-buffer block size (perf review)
_VMEM_LIMIT = 40 * 1024 * 1024    # >= worst-case 32 MiB footprint; safe on v5e/v6e/v7x
_LANES = 128


def _add_kernel(a_ref, b_ref, o_ref):
    # Elementwise VPU add on the current VMEM tile; dtype promotion happens
    # in-register so HBM traffic stays at the inputs' native widths.
    # b_ref is either a full streamed tile or a (1,1) pinned scalar block
    # (broadcast in-register).
    o_ref[...] = a_ref[...].astype(o_ref.dtype) + b_ref[...].astype(o_ref.dtype)


def _launch_add_2d(a2, b, out_dtype, *, b_pinned):
    """Streams a2 (and b unless pinned) through the add kernel. a2 is (rows, width)."""
    rows, width = a2.shape

    itemsizes = [jnp.dtype(a2.dtype).itemsize, jnp.dtype(out_dtype).itemsize]
    if not b_pinned:
        itemsizes.append(jnp.dtype(b.dtype).itemsize)
    max_item, min_item = max(itemsizes), min(itemsizes)

    # Align row tile to the sublane packing of the narrowest dtype in play so
    # packed (bf16/int8) stores at block edges stay unmasked.
    pack = max(8, 32 // min_item)          # f32 -> 8, bf16 -> 16, int8/fp8 -> 32
    row_tile = max(pack, (_BLOCK_BYTES // (width * max_item)) // pack * pack)
    if rows <= row_tile:
        row_tile = rows                    # full-extent block: always layout-legal
        n_steps = 1
    else:
        n_steps = pl.cdiv(rows, row_tile)  # partial last block is masked

    def stream_spec():
        if n_steps >= 8:
            # Long streams: deeper input buffering hides DMA issue jitter.
            # (2 inputs x 3 + 1 output x 2) x <=4 MiB = <=32 MiB, inside limit.
            return pl.BlockSpec((row_tile, width), lambda i: (i, 0),
                                pipeline_mode=pl.Buffered(3))
        return pl.BlockSpec((row_tile, width), lambda i: (i, 0))

    if b_pinned:
        # Pinned size-1 operand: same (0,0) block every step, broadcast in-register.
        b_spec = pl.BlockSpec((1, 1), lambda i: (0, 0))
    else:
        b_spec = stream_spec()

    bytes_accessed = rows * width * (jnp.dtype(a2.dtype).itemsize
                                     + jnp.dtype(out_dtype).itemsize)
    if not b_pinned:
        bytes_accessed += rows * width * jnp.dtype(b.dtype).itemsize

    # TODO(synk): confirm on xprof that ("parallel",) really shards this grid
    # across both TensorCores on v7x; if only one core is active, switch to
    # pltpu.CORE_PARALLEL (no-op concern on single-TC v5e/v6e).
    return pl.pallas_call(
        _add_kernel,
        out_shape=jax.ShapeDtypeStruct((rows, width), out_dtype),
        grid_spec=pltpu.PrefetchScalarGridSpec(
            num_scalar_prefetch=0,
            grid=(n_steps,),
            in_specs=[stream_spec(), b_spec],
            out_specs=pl.BlockSpec((row_tile, width), lambda i: (i, 0)),
        ),
        compiler_params=pltpu.CompilerParams(
            dimension_semantics=("parallel",),
            vmem_limit_bytes=_VMEM_LIMIT,
        ),
        cost_estimate=pl.CostEstimate(
            flops=rows * width,
            transcendentals=0,
            bytes_accessed=bytes_accessed,
        ),
    )(a2, b)


def plus(x: jax.Array, y: jax.Array) -> jax.Array:
    """Elementwise x + y via a Pallas TPU kernel (matches torch `x + y`)."""
    out_shape = jnp.broadcast_shapes(x.shape, y.shape)
    out_dtype = jnp.result_type(x.dtype, y.dtype)
    total = math.prod(out_shape)

    if total == 0:
        return jnp.zeros(out_shape, out_dtype)

    # Tiny inputs: launch overhead dominates and a grid=(1,) kernel can't
    # pipeline anything -> let XLA's fused elementwise add handle it.
    if total * jnp.dtype(out_dtype).itemsize < _TINY_BYTES:
        return jnp.add(x, y)

    # Size-1 (scalar-like) operand: stream only the big tensor and pin the
    # scalar -> ~1/3 less HBM traffic vs materializing the broadcast.
    x_size, y_size = math.prod(x.shape), math.prod(y.shape)
    scalar = tensor = None
    if x_size == 1 and y_size == total:
        scalar, tensor = x, y
    elif y_size == 1 and x_size == total:
        scalar, tensor = y, x
    elif x.shape != y.shape:
        # General broadcast (e.g. per-channel bias): materialize for now.
        # TODO(synk): pin broadcast dims via BlockSpec index_map instead of
        # materializing if mismatched-shape adds ever become hot.
        x = jnp.broadcast_to(x, out_shape)
        y = jnp.broadcast_to(y, out_shape)

    # Widest lane-dense slab width that divides `total`. If nothing divides
    # (ragged), run the kernel on the aligned prefix and handle the
    # <width-element tail with a tiny XLA add (no full-array pad, no
    # full-output slice).
    remainder = 0
    for w in (4096, 2048, 1024, 512, 256, _LANES):
        if total % w == 0:
            width = w
            break
    else:
        width = 4096                      # total >= 65536 here, so this fits
        remainder = total % width
    aligned = total - remainder
    rows = aligned // width

    if tensor is None:
        af = x.reshape(-1)
        bf = y.reshape(-1)
        a2 = (af if remainder == 0 else af[:aligned]).reshape(rows, width)
        b2 = (bf if remainder == 0 else bf[:aligned]).reshape(rows, width)
        out2 = _launch_add_2d(a2, b2, out_dtype, b_pinned=False)
    else:
        af = tensor.reshape(-1)
        a2 = (af if remainder == 0 else af[:aligned]).reshape(rows, width)
        s11 = scalar.reshape(1, 1).astype(out_dtype)
        out2 = _launch_add_2d(a2, s11, out_dtype, b_pinned=True)

    if remainder == 0:
        return out2.reshape(out_shape)    # pure metadata reshape

    # Ragged tail (< width elements): tiny XLA add; one concat writes the
    # final output once.
    if tensor is None:
        tail = (af[aligned:] + bf[aligned:]).astype(out_dtype)
    else:
        tail = (af[aligned:] + scalar.reshape(())).astype(out_dtype)
    return jnp.concatenate([out2.reshape(-1), tail]).reshape(out_shape)


if __name__ == "__main__":
    key = jax.random.PRNGKey(0)
    k = jax.random.split(key, 10)

    def check(out, ref, tag, atol=1e-6, rtol=1e-6):
        assert out.shape == ref.shape, (tag, out.shape, ref.shape)
        assert out.dtype == ref.dtype, (tag, out.dtype, ref.dtype)
        assert jnp.allclose(out, ref, atol=atol, rtol=rtol), tag

    # 1) Main aligned path through the Pallas kernel (NCHW-style activations).
    x1 = jax.random.normal(k[0], (2, 4, 128, 128), dtype=jnp.float32)
    y1 = jax.random.normal(k[1], (2, 4, 128, 128), dtype=jnp.float32)
    o1 = plus(x1, y1)
    jax.block_until_ready(o1)
    check(o1, x1 + y1, "aligned")

    # 2) Tiny path (short-circuits to XLA fused add).
    x2 = jax.random.normal(k[2], (2, 4, 16, 16), dtype=jnp.float32)
    y2 = jax.random.normal(k[3], (2, 4, 16, 16), dtype=jnp.float32)
    check(plus(x2, y2), x2 + y2, "tiny")

    # 3) Ragged path (total % 128 != 0): kernel on aligned prefix + XLA tail.
    x3 = jax.random.normal(k[4], (1, 3, 181, 157), dtype=jnp.float32)
    y3 = jax.random.normal(k[5], (1, 3, 181, 157), dtype=jnp.float32)
    check(plus(x3, y3), x3 + y3, "ragged")

    # 4) Scalar broadcast path (scalar pinned via (1,1) block, not materialized).
    x4 = jax.random.normal(k[6], (2, 4, 128, 128), dtype=jnp.float32)
    y4 = jnp.asarray(0.5, dtype=jnp.float32)
    check(plus(x4, y4), x4 + y4, "scalar")

    # 5) Mixed dtype (in-register promotion bf16 + f32 -> f32).
    x5 = jax.random.normal(k[7], (2, 4, 128, 128), dtype=jnp.bfloat16)
    y5 = jax.random.normal(k[8], (2, 4, 128, 128), dtype=jnp.float32)
    check(plus(x5, y5), x5 + y5, "mixed", atol=1e-5, rtol=1e-5)

    print("KERNEL_OK")
</pallas_src>

<mosaic_0001>
module attributes {stable_mosaic.version = 11 : i64} {
  func.func @_add_kernel(%arg0: i32, %arg1: memref<32x4096xf32, #tpu.memory_space<vmem>>, %arg2: memref<32x4096xf32, #tpu.memory_space<vmem>>, %arg3: memref<32x4096xf32, #tpu.memory_space<vmem>>) attributes {dimension_semantics = [#tpu.dimension_semantics<parallel>], iteration_bounds = array<i64: 1>, scalar_prefetch = 0 : i64, scratch_operands = 0 : i64, tpu.core_type = #tpu.core_type<tc>, window_params = [{transform_indices = @transform_0, window_bounds = array<i64: 32, 4096>}, {transform_indices = @transform_1, window_bounds = array<i64: 32, 4096>}, {transform_indices = @transform_2, window_bounds = array<i64: 32, 4096>}]} {
    %c0 = arith.constant 0 : index
    %c0_0 = arith.constant 0 : index
    %0 = vector.load %arg1[%c0, %c0_0] : memref<32x4096xf32, #tpu.memory_space<vmem>>, vector<32x4096xf32>
    %c0_1 = arith.constant 0 : index
    %c0_2 = arith.constant 0 : index
    %1 = vector.load %arg2[%c0_1, %c0_2] : memref<32x4096xf32, #tpu.memory_space<vmem>>, vector<32x4096xf32>
    %2 = arith.addf %0, %1 : vector<32x4096xf32>
    %c0_3 = arith.constant 0 : index
    %c0_4 = arith.constant 0 : index
    %3 = vector.load %arg3[%c0_3, %c0_4] : memref<32x4096xf32, #tpu.memory_space<vmem>>, vector<32x4096xf32>
    tpu.vector_store %arg3[%c0_3, %c0_4], %2 {strides = array<i32>} : memref<32x4096xf32, #tpu.memory_space<vmem>>, vector<32x4096xf32>,
    return
  }
  func.func @transform_0(%arg0: i32) -> (i32, i32) {
    %c0_i32 = arith.constant 0 : i32
    %c0_i32_0 = arith.constant 0 : i32
    return %arg0, %c0_i32 : i32, i32
  }
  func.func @transform_1(%arg0: i32) -> (i32, i32) {
    %c0_i32 = arith.constant 0 : i32
    %c0_i32_0 = arith.constant 0 : i32
    return %arg0, %c0_i32 : i32, i32
  }
  func.func @transform_2(%arg0: i32) -> (i32, i32) {
    %c0_i32 = arith.constant 0 : i32
    %c0_i32_0 = arith.constant 0 : i32
    return %arg0, %c0_i32 : i32, i32
  }
}

</mosaic_0001>

<llo_original>
// kernel: tpu_custom_call.1
$region0: #{tpu_custom_call.1}
  #allocation0 [shape = 'u32[]', space=smem, size = 0x4, offset = 0x4, fixed_abs, tag = 'smem constant byte address 0x4 - core index']
  #allocation1 [shape = 'u32[144,128]{1,0:T(1,128)}', space=vmem, size = 0x12000, scoped, tag = 'internal scratch']
  %s0 = inlined_call_operand.hbm [shape: f32[32,4096], index: 0, kind: input, shape index: {}]
  %s1 = inlined_call_operand.hbm [shape: f32[32,4096], index: 1, kind: input, shape index: {}]
  %s2 = inlined_call_operand.hbm [shape: f32[32,4096], index: 2, kind: output, shape index: {}]
  %s3 = sld [smem:[#allocation0]]
  $region26: #{tpu_custom_call.1} parent=0
    _
  %s5 = ssub.s32 1, %s3
  %s6 = scalar_select 0, %s5, %s3
  $region1: #{tpu_custom_call.1} parent=0
    #allocation2 [shape = 'u8[524288]{0}', space=vmem, size = 0x80000, scoped, tag = 'input window, operand 0, single buffered']
    #allocation3 [shape = 's32[1]{0}', space=sflag, size = 0x4, scoped, tag = 'scoped memory for tpu_custom_call.1']
    #allocation4 [shape = 's32[1]{0}', space=sflag, size = 0x4, scoped, tag = 'scoped memory for tpu_custom_call.1']
    #allocation5 [shape = 'u8[524288]{0}', space=vmem, size = 0x80000, scoped, tag = 'input window, operand 1, single buffered']
    #allocation6 [shape = 's32[1]{0}', space=sflag, size = 0x4, scoped, tag = 'scoped memory for tpu_custom_call.1']
    #allocation7 [shape = 'u8[524288]{0}', space=vmem, size = 0x80000, scoped, tag = 'output window, operand 0, single buffered']
    %7 = vsyncpa [#allocation3], 0
    %8 = vsyncpa [#allocation6], 0
    %9 = vsyncpa [#allocation4], 0
    // Predicated region
    $region2: #{tpu_custom_call.1} parent=1 // pred_check
      _
    $region3: #{tpu_custom_call.1} parent=1 // pred_check_branch
      %11 = sbr.rel (0) target = $region5
    $region4: #{tpu_custom_call.1} parent=1 // pred_region
      %s13 = ssub.s32 16384, 16384
      %14 = vsyncadd [#allocation3], %s13
      %s15 = sshll.u32 [#allocation2], 4
      %s16 = int_to_ptr.vmem [resolvable:$true] %s15
      %21 = dma.hbm_to_vmem [thread:$0]  %s0, 16384, %s16, [#allocation3], 4096, 4096, 256
    $region5: #{tpu_custom_call.1} parent=1 // pred_fallthru
      _
    // Predicated region
    $region6: #{tpu_custom_call.1} parent=1 // pred_check
      _
    $region7: #{tpu_custom_call.1} parent=1 // pred_check_branch
      %23 = sbr.rel (0) target = $region9
    $region8: #{tpu_custom_call.1} parent=1 // pred_region
      %s25 = ssub.s32 16384, 16384
      %26 = vsyncadd [#allocation6], %s25
      %s27 = sshll.u32 [#allocation5], 4
      %s28 = int_to_ptr.vmem [resolvable:$true] %s27
      %33 = dma.hbm_to_vmem [thread:$0]  %s1, 16384, %s28, [#allocation6], 4096, 4096, 256
    $region9: #{tpu_custom_call.1} parent=1 // pred_fallthru
      _
    // Predicated region
    $region10: #{tpu_custom_call.1} parent=1 // pred_check
      _
    $region11: #{tpu_custom_call.1} parent=1 // pred_check_branch
      %35 = sbr.rel (0) target = $region13
    $region12: #{tpu_custom_call.1} parent=1 // pred_region
      %36 = dma.done [#allocation3], 16384
    $region13: #{tpu_custom_call.1} parent=1 // pred_fallthru
      _
    // Predicated region
    $region14: #{tpu_custom_call.1} parent=1 // pred_check
      _
    $region15: #{tpu_custom_call.1} parent=1 // pred_check_branch
      %38 = sbr.rel (0) target = $region17
    $region16: #{tpu_custom_call.1} parent=1 // pred_region
      %39 = dma.done [#allocation6], 16384
    $region17: #{tpu_custom_call.1} parent=1 // pred_fallthru
      _
    %v40 = vld [vmem:[#allocation2] sm:$0xff]
    %v41 = vld [vmem:[#allocation2 + $0x8] sm:$0xff]
    %v42 = vld [vmem:[#allocation2 + $0x10] sm:$0xff]
    %v43 = vld [vmem:[#allocation2 + $0x18] sm:$0xff]
    %v44 = vld [vmem:[#allocation2 + $0x20] sm:$0xff]
    %v45 = vld [vmem:[#allocation2 + $0x28] sm:$0xff]
    %v46 = vld [vmem:[#allocation2 + $0x30] sm:$0xff]
    %v47 = vld [vmem:[#allocation2 + $0x38] sm:$0xff]
    %v48 = vld [vmem:[#allocation2 + $0x40] sm:$0xff]
    %v49 = vld [vmem:[#allocation2 + $0x48] sm:$0xff]
    %v50 = vld [vmem:[#allocation2 + $0x50] sm:$0xff]
    %v51 = vld [vmem:[#allocation2 + $0x58] sm:$0xff]
    %v52 = vld [vmem:[#allocation2 + $0x60] sm:$0xff]
    %v53 = vld [vmem:[#allocation2 + $0x68] sm:$0xff]
    %v54 = vld [vmem:[#allocation2 + $0x70] sm:$0xff]
    %v55 = vld [vmem:[#allocation2 + $0x78] sm:$0xff]
    %v56 = vld [vmem:[#allocation2 + $0x80] sm:$0xff]
    %v57 = vld [vmem:[#allocation2 + $0x88] sm:$0xff]
    %v58 = vld [vmem:[#allocation2 + $0x90] sm:$0xff]
    %v59 = vld [vmem:[#allocation2 + $0x98] sm:$0xff]
    %v60 = vld [vmem:[#allocation2 + $0xa0] sm:$0xff]
    %v61 = vld [vmem:[#allocation2 + $0xa8] sm:$0xff]
    %v62 = vld [vmem:[#allocation2 + $0xb0] sm:$0xff]
    %v63 = vld [vmem:[#allocation2 + $0xb8] sm:$0xff]
    %v64 = vld [vmem:[#allocation2 + $0xc0] sm:$0xff]
    %v65 = vld [vmem:[#allocation2 + $0xc8] sm:$0xff]
    %v66 = vld [vmem:[#allocation2 + $0xd0] sm:$0xff]
    %v67 = vld [vmem:[#allocation2 + $0xd8] sm:$0xff]
    %v68 = vld [vmem:[#allocation2 + $0xe0] sm:$0xff]
    %v69 = vld [vmem:[#allocation2 + $0xe8] sm:$0xff]
    %v70 = vld [vmem:[#allocation2 + $0xf0] sm:$0xff]
    %v71 = vld [vmem:[#allocation2 + $0xf8] sm:$0xff]
    %v72 = vld [vmem:[#allocation2 + $0x100] sm:$0xff]
    %v73 = vld [vmem:[#allocation2 + $0x108] sm:$0xff]
    %v74 = vld [vmem:[#allocation2 + $0x110] sm:$0xff]
    %v75 = vld [vmem:[#allocation2 + $0x118] sm:$0xff]
    %v76 = vld [vmem:[#allocation2 + $0x120] sm:$0xff]
    %v77 = vld [vmem:[#allocation2 + $0x128] sm:$0xff]
    %v78 = vld [vmem:[#allocation2 + $0x130] sm:$0xff]
    %v79 = vld [vmem:[#allocation2 + $0x138] sm:$0xff]
    %v80 = vld [vmem:[#allocation2 + $0x140] sm:$0xff]
    %v81 = vld [vmem:[#allocation2 + $0x148] sm:$0xff]
    %v82 = vld [vmem:[#allocation2 + $0x150] sm:$0xff]
    %v83 = vld [vmem:[#allocation2 + $0x158] sm:$0xff]
    %v84 = vld [vmem:[#allocation2 + $0x160] sm:$0xff]
    %v85 = vld [vmem:[#allocation2 + $0x168] sm:$0xff]
    %v86 = vld [vmem:[#allocation2 + $0x170] sm:$0xff]
    %v87 = vld [vmem:[#allocation2 + $0x178] sm:$0xff]
    %v88 = vld [vmem:[#allocation2 + $0x180] sm:$0xff]
    %v89 = vld [vmem:[#allocation2 + $0x188] sm:$0xff]
    %v90 = vld [vmem:[#allocation2 + $0x190] sm:$0xff]
    %v91 = vld [vmem:[#allocation2 + $0x198] sm:$0xff]
    %v92 = vld [vmem:[#allocation2 + $0x1a0] sm:$0xff]
    %v93 = vld [vmem:[#allocation2 + $0x1a8] sm:$0xff]
    %v94 = vld [vmem:[#allocation2 + $0x1b0] sm:$0xff]
    %v95 = vld [vmem:[#allocation2 + $0x1b8] sm:$0xff]
    %v96 = vld [vmem:[#allocation2 + $0x1c0] sm:$0xff]
    %v97 = vld [vmem:[#allocation2 + $0x1c8] sm:$0xff]
    %v98 = vld [vmem:[#allocation2 + $0x1d0] sm:$0xff]
    %v99 = vld [vmem:[#allocation2 + $0x1d8] sm:$0xff]
    %v100 = vld [vmem:[#allocation2 + $0x1e0] sm:$0xff]
    %v101 = vld [vmem:[#allocation2 + $0x1e8] sm:$0xff]
    %v102 = vld [vmem:[#allocation2 + $0x1f0] sm:$0xff]
    %v103 = vld [vmem:[#allocation2 + $0x1f8] sm:$0xff]
    %v104 = vld [vmem:[#allocation2 + $0x200] sm:$0xff]
    %v105 = vld [vmem:[#allocation2 + $0x208] sm:$0xff]
    %v106 = vld [vmem:[#allocation2 + $0x210] sm:$0xff]
    %v107 = vld [vmem:[#allocation2 + $0x218] sm:$0xff]
    %v108 = vld [vmem:[#allocation2 + $0x220] sm:$0xff]
    %v109 = vld [vmem:[#allocation2 + $0x228] sm:$0xff]
    %v110 = vld [vmem:[#allocation2 + $0x230] sm:$0xff]
    %v111 = vld [vmem:[#allocation2 + $0x238] sm:$0xff]
    %v112 = vld [vmem:[#allocation2 + $0x240] sm:$0xff]
    %v113 = vld [vmem:[#allocation2 + $0x248] sm:$0xff]
    %v114 = vld [vmem:[#allocation2 + $0x250] sm:$0xff]
    %v115 = vld [vmem:[#allocation2 + $0x258] sm:$0xff]
    %v116 = vld [vmem:[#allocation2 + $0x260] sm:$0xff]
    %v117 = vld [vmem:[#allocation2 + $0x268] sm:$0xff]
    %v118 = vld [vmem:[#allocation2 + $0x270] sm:$0xff]
    %v119 = vld [vmem:[#allocation2 + $0x278] sm:$0xff]
    %v120 = vld [vmem:[#allocation2 + $0x280] sm:$0xff]
    %v121 = vld [vmem:[#allocation2 + $0x288] sm:$0xff]
    %v122 = vld [vmem:[#allocation2 + $0x290] sm:$0xff]
    %v123 = vld [vmem:[#allocation2 + $0x298] sm:$0xff]
    %v124 = vld [vmem:[#allocation2 + $0x2a0] sm:$0xff]
    %v125 = vld [vmem:[#allocation2 + $0x2a8] sm:$0xff]
    %v126 = vld [vmem:[#allocation2 + $0x2b0] sm:$0xff]
    %v127 = vld [vmem:[#allocation2 + $0x2b8] sm:$0xff]
    %v128 = vld [vmem:[#allocation2 + $0x2c0] sm:$0xff]
    %v129 = vld [vmem:[#allocation2 + $0x2c8] sm:$0xff]
    %v130 = vld [vmem:[#allocation2 + $0x2d0] sm:$0xff]
    %v131 = vld [vmem:[#allocation2 + $0x2d8] sm:$0xff]
    %v132 = vld [vmem:[#allocation2 + $0x2e0] sm:$0xff]
    %v133 = vld [vmem:[#allocation2 + $0x2e8] sm:$0xff]
    %v134 = vld [vmem:[#allocation2 + $0x2f0] sm:$0xff]
    %v135 = vld [vmem:[#allocation2 + $0x2f8] sm:$0xff]
    %v136 = vld [vmem:[#allocation2 + $0x300] sm:$0xff]
    %v137 = vld [vmem:[#allocation2 + $0x308] sm:$0xff]
    %v138 = vld [vmem:[#allocation2 + $0x310] sm:$0xff]
    %v139 = vld [vmem:[#allocation2 + $0x318] sm:$0xff]
    %v140 = vld [vmem:[#allocation2 + $0x320] sm:$0xff]
    %v141 = vld [vmem:[#allocation2 + $0x328] sm:$0xff]
    %v142 = vld [vmem:[#allocation2 + $0x330] sm:$0xff]
    %v143 = vld [vmem:[#allocation2 + $0x338] sm:$0xff]
    %v144 = vld [vmem:[#allocation2 + $0x340] sm:$0xff]
    %v145 = vld [vmem:[#allocation2 + $0x348] sm:$0xff]
    %v146 = vld [vmem:[#allocation2 + $0x350] sm:$0xff]
    %v147 = vld [vmem:[#allocation2 + $0x358] sm:$0xff]
    %v148 = vld [vmem:[#allocation2 + $0x360] sm:$0xff]
    %v149 = vld [vmem:[#allocation2 + $0x368] sm:$0xff]
    %v150 = vld [vmem:[#allocation2 + $0x370] sm:$0xff]
    %v151 = vld [vmem:[#allocation2 + $0x378] sm:$0xff]
    %v152 = vld [vmem:[#allocation2 + $0x380] sm:$0xff]
    %v153 = vld [vmem:[#allocation2 + $0x388] sm:$0xff]
    %v154 = vld [vmem:[#allocation2 + $0x390] sm:$0xff]
    %v155 = vld [vmem:[#allocation2 + $0x398] sm:$0xff]
    %v156 = vld [vmem:[#allocation2 + $0x3a0] sm:$0xff]
    %v157 = vld [vmem:[#allocation2 + $0x3a8] sm:$0xff]
    %v158 = vld [vmem:[#allocation2 + $0x3b0] sm:$0xff]
    %v159 = vld [vmem:[#allocation2 + $0x3b8] sm:$0xff]
    %v160 = vld [vmem:[#allocation2 + $0x3c0] sm:$0xff]
    %v161 = vld [vmem:[#allocation2 + $0x3c8] sm:$0xff]
    %v162 = vld [vmem:[#allocation2 + $0x3d0] sm:$0xff]
    %v163 = vld [vmem:[#allocation2 + $0x3d8] sm:$0xff]
    %v164 = vld [vmem:[#allocation2 + $0x3e0] sm:$0xff]
    %v165 = vld [vmem:[#allocation2 + $0x3e8] sm:$0xff]
    %v166 = vld [vmem:[#allocation2 + $0x3f0] sm:$0xff]
    %v167 = vld [vmem:[#allocation2 + $0x3f8] sm:$0xff]
    %v168 = vld [vmem:[#allocation5] sm:$0xff]
    %v169 = vld [vmem:[#allocation5 + $0x8] sm:$0xff]
    %v170 = vld [vmem:[#allocation5 + $0x10] sm:$0xff]
    %v171 = vld [vmem:[#allocation5 + $0x18] sm:$0xff]
    %v172 = vld [vmem:[#allocation5 + $0x20] sm:$0xff]
    %v173 = vld [vmem:[#allocation5 + $0x28] sm:$0xff]
    %v174 = vld [vmem:[#allocation5 + $0x30] sm:$0xff]
    %v175 = vld [vmem:[#allocation5 + $0x38] sm:$0xff]
    %v176 = vld [vmem:[#allocation5 + $0x40] sm:$0xff]
    %v177 = vld [vmem:[#allocation5 + $0x48] sm:$0xff]
    %v178 = vld [vmem:[#allocation5 + $0x50] sm:$0xff]
    %v179 = vld [vmem:[#allocation5 + $0x58] sm:$0xff]
    %v180 = vld [vmem:[#allocation5 + $0x60] sm:$0xff]
    %v181 = vld [vmem:[#allocation5 + $0x68] sm:$0xff]
    %v182 = vld [vmem:[#allocation5 + $0x70] sm:$0xff]
    %v183 = vld [vmem:[#allocation5 + $0x78] sm:$0xff]
    %v184 = vld [vmem:[#allocation5 + $0x80] sm:$0xff]
    %v185 = vld [vmem:[#allocation5 + $0x88] sm:$0xff]
    %v186 = vld [vmem:[#allocation5 + $0x90] sm:$0xff]
    %v187 = vld [vmem:[#allocation5 + $0x98] sm:$0xff]
    %v188 = vld [vmem:[#allocation5 + $0xa0] sm:$0xff]
    %v189 = vld [vmem:[#allocation5 + $0xa8] sm:$0xff]
    %v190 = vld [vmem:[#allocation5 + $0xb0] sm:$0xff]
    %v191 = vld [vmem:[#allocation5 + $0xb8] sm:$0xff]
    %v192 = vld [vmem:[#allocation5 + $0xc0] sm:$0xff]
    %v193 = vld [vmem:[#allocation5 + $0xc8] sm:$0xff]
    %v194 = vld [vmem:[#allocation5 + $0xd0] sm:$0xff]
    %v195 = vld [vmem:[#allocation5 + $0xd8] sm:$0xff]
    %v196 = vld [vmem:[#allocation5 + $0xe0] sm:$0xff]
    %v197 = vld [vmem:[#allocation5 + $0xe8] sm:$0xff]
    %v198 = vld [vmem:[#allocation5 + $0xf0] sm:$0xff]
    %v199 = vld [vmem:[#allocation5 + $0xf8] sm:$0xff]
    %v200 = vld [vmem:[#allocation5 + $0x100] sm:$0xff]
    %v201 = vld [vmem:[#allocation5 + $0x108] sm:$0xff]
    %v202 = vld [vmem:[#allocation5 + $0x110] sm:$0xff]
    %v203 = vld [vmem:[#allocation5 + $0x118] sm:$0xff]
    %v204 = vld [vmem:[#allocation5 + $0x120] sm:$0xff]
    %v205 = vld [vmem:[#allocation5 + $0x128] sm:$0xff]
    %v206 = vld [vmem:[#allocation5 + $0x130] sm:$0xff]
    %v207 = vld [vmem:[#allocation5 + $0x138] sm:$0xff]
    %v208 = vld [vmem:[#allocation5 + $0x140] sm:$0xff]
    %v209 = vld [vmem:[#allocation5 + $0x148] sm:$0xff]
    %v210 = vld [vmem:[#allocation5 + $0x150] sm:$0xff]
    %v211 = vld [vmem:[#allocation5 + $0x158] sm:$0xff]
    %v212 = vld [vmem:[#allocation5 + $0x160] sm:$0xff]
    %v213 = vld [vmem:[#allocation5 + $0x168] sm:$0xff]
    %v214 = vld [vmem:[#allocation5 + $0x170] sm:$0xff]
    %v215 = vld [vmem:[#allocation5 + $0x178] sm:$0xff]
    %v216 = vld [vmem:[#allocation5 + $0x180] sm:$0xff]
    %v217 = vld [vmem:[#allocation5 + $0x188] sm:$0xff]
    %v218 = vld [vmem:[#allocation5 + $0x190] sm:$0xff]
    %v219 = vld [vmem:[#allocation5 + $0x198] sm:$0xff]
    %v220 = vld [vmem:[#allocation5 + $0x1a0] sm:$0xff]
    %v221 = vld [vmem:[#allocation5 + $0x1a8] sm:$0xff]
    %v222 = vld [vmem:[#allocation5 + $0x1b0] sm:$0xff]
    %v223 = vld [vmem:[#allocation5 + $0x1b8] sm:$0xff]
    %v224 = vld [vmem:[#allocation5 + $0x1c0] sm:$0xff]
    %v225 = vld [vmem:[#allocation5 + $0x1c8] sm:$0xff]
    %v226 = vld [vmem:[#allocation5 + $0x1d0] sm:$0xff]
    %v227 = vld [vmem:[#allocation5 + $0x1d8] sm:$0xff]
    %v228 = vld [vmem:[#allocation5 + $0x1e0] sm:$0xff]
    %v229 = vld [vmem:[#allocation5 + $0x1e8] sm:$0xff]
    %v230 = vld [vmem:[#allocation5 + $0x1f0] sm:$0xff]
    %v231 = vld [vmem:[#allocation5 + $0x1f8] sm:$0xff]
    %v232 = vld [vmem:[#allocation5 + $0x200] sm:$0xff]
    %v233 = vld [vmem:[#allocation5 + $0x208] sm:$0xff]
    %v234 = vld [vmem:[#allocation5 + $0x210] sm:$0xff]
    %v235 = vld [vmem:[#allocation5 + $0x218] sm:$0xff]
    %v236 = vld [vmem:[#allocation5 + $0x220] sm:$0xff]
    %v237 = vld [vmem:[#allocation5 + $0x228] sm:$0xff]
    %v238 = vld [vmem:[#allocation5 + $0x230] sm:$0xff]
    %v239 = vld [vmem:[#allocation5 + $0x238] sm:$0xff]
    %v240 = vld [vmem:[#allocation5 + $0x240] sm:$0xff]
    %v241 = vld [vmem:[#allocation5 + $0x248] sm:$0xff]
    %v242 = vld [vmem:[#allocation5 + $0x250] sm:$0xff]
    %v243 = vld [vmem:[#allocation5 + $0x258] sm:$0xff]
    %v244 = vld [vmem:[#allocation5 + $0x260] sm:$0xff]
    %v245 = vld [vmem:[#allocation5 + $0x268] sm:$0xff]
    %v246 = vld [vmem:[#allocation5 + $0x270] sm:$0xff]
    %v247 = vld [vmem:[#allocation5 + $0x278] sm:$0xff]
    %v248 = vld [vmem:[#allocation5 + $0x280] sm:$0xff]
    %v249 = vld [vmem:[#allocation5 + $0x288] sm:$0xff]
    %v250 = vld [vmem:[#allocation5 + $0x290] sm:$0xff]
    %v251 = vld [vmem:[#allocation5 + $0x298] sm:$0xff]
    %v252 = vld [vmem:[#allocation5 + $0x2a0] sm:$0xff]
    %v253 = vld [vmem:[#allocation5 + $0x2a8] sm:$0xff]
    %v254 = vld [vmem:[#allocation5 + $0x2b0] sm:$0xff]
    %v255 = vld [vmem:[#allocation5 + $0x2b8] sm:$0xff]
    %v256 = vld [vmem:[#allocation5 + $0x2c0] sm:$0xff]
    %v257 = vld [vmem:[#allocation5 + $0x2c8] sm:$0xff]
    %v258 = vld [vmem:[#allocation5 + $0x2d0] sm:$0xff]
    %v259 = vld [vmem:[#allocation5 + $0x2d8] sm:$0xff]
    %v260 = vld [vmem:[#allocation5 + $0x2e0] sm:$0xff]
    %v261 = vld [vmem:[#allocation5 + $0x2e8] sm:$0xff]
    %v262 = vld [vmem:[#allocation5 + $0x2f0] sm:$0xff]
    %v263 = vld [vmem:[#allocation5 + $0x2f8] sm:$0xff]
    %v264 = vld [vmem:[#allocation5 + $0x300] sm:$0xff]
    %v265 = vld [vmem:[#allocation5 + $0x308] sm:$0xff]
    %v266 = vld [vmem:[#allocation5 + $0x310] sm:$0xff]
    %v267 = vld [vmem:[#allocation5 + $0x318] sm:$0xff]
    %v268 = vld [vmem:[#allocation5 + $0x320] sm:$0xff]
    %v269 = vld [vmem:[#allocation5 + $0x328] sm:$0xff]
    %v270 = vld [vmem:[#allocation5 + $0x330] sm:$0xff]
    %v271 = vld [vmem:[#allocation5 + $0x338] sm:$0xff]
    %v272 = vld [vmem:[#allocation5 + $0x340] sm:$0xff]
    %v273 = vld [vmem:[#allocation5 + $0x348] sm:$0xff]
    %v274 = vld [vmem:[#allocation5 + $0x350] sm:$0xff]
    %v275 = vld [vmem:[#allocation5 + $0x358] sm:$0xff]
    %v276 = vld [vmem:[#allocation5 + $0x360] sm:$0xff]
    %v277 = vld [vmem:[#allocation5 + $0x368] sm:$0xff]
    %v278 = vld [vmem:[#allocation5 + $0x370] sm:$0xff]
    %v279 = vld [vmem:[#allocation5 + $0x378] sm:$0xff]
    %v280 = vld [vmem:[#allocation5 + $0x380] sm:$0xff]
    %v281 = vld [vmem:[#allocation5 + $0x388] sm:$0xff]
    %v282 = vld [vmem:[#allocation5 + $0x390] sm:$0xff]
    %v283 = vld [vmem:[#allocation5 + $0x398] sm:$0xff]
    %v284 = vld [vmem:[#allocation5 + $0x3a0] sm:$0xff]
    %v285 = vld [vmem:[#allocation5 + $0x3a8] sm:$0xff]
    %v286 = vld [vmem:[#allocation5 + $0x3b0] sm:$0xff]
    %v287 = vld [vmem:[#allocation5 + $0x3b8] sm:$0xff]
    %v288 = vld [vmem:[#allocation5 + $0x3c0] sm:$0xff]
    %v289 = vld [vmem:[#allocation5 + $0x3c8] sm:$0xff]
    %v290 = vld [vmem:[#allocation5 + $0x3d0] sm:$0xff]
    %v291 = vld [vmem:[#allocation5 + $0x3d8] sm:$0xff]
    %v292 = vld [vmem:[#allocation5 + $0x3e0] sm:$0xff]
    %v293 = vld [vmem:[#allocation5 + $0x3e8] sm:$0xff]
    %v294 = vld [vmem:[#allocation5 + $0x3f0] sm:$0xff]
    %v295 = vld [vmem:[#allocation5 + $0x3f8] sm:$0xff]
    %v296 = vadd.f32 %v40, %v168
    %v297 = vadd.f32 %v41, %v169
    %v298 = vadd.f32 %v42, %v170
    %v299 = vadd.f32 %v43, %v171
    %v300 = vadd.f32 %v44, %v172
    %v301 = vadd.f32 %v45, %v173
    %v302 = vadd.f32 %v46, %v174
    %v303 = vadd.f32 %v47, %v175
    %v304 = vadd.f32 %v48, %v176
    %v305 = vadd.f32 %v49, %v177
    %v306 = vadd.f32 %v50, %v178
    %v307 = vadd.f32 %v51, %v179
    %v308 = vadd.f32 %v52, %v180
    %v309 = vadd.f32 %v53, %v181
    %v310 = vadd.f32 %v54, %v182
    %v311 = vadd.f32 %v55, %v183
    %v312 = vadd.f32 %v56, %v184
    %v313 = vadd.f32 %v57, %v185
    %v314 = vadd.f32 %v58, %v186
    %v315 = vadd.f32 %v59, %v187
    %v316 = vadd.f32 %v60, %v188
    %v317 = vadd.f32 %v61, %v189
    %v318 = vadd.f32 %v62, %v190
    %v319 = vadd.f32 %v63, %v191
    %v320 = vadd.f32 %v64, %v192
    %v321 = vadd.f32 %v65, %v193
    %v322 = vadd.f32 %v66, %v194
    %v323 = vadd.f32 %v67, %v195
    %v324 = vadd.f32 %v68, %v196
    %v325 = vadd.f32 %v69, %v197
    %v326 = vadd.f32 %v70, %v198
    %v327 = vadd.f32 %v71, %v199
    %v328 = vadd.f32 %v72, %v200
    %v329 = vadd.f32 %v73, %v201
    %v330 = vadd.f32 %v74, %v202
    %v331 = vadd.f32 %v75, %v203
    %v332 = vadd.f32 %v76, %v204
    %v333 = vadd.f32 %v77, %v205
    %v334 = vadd.f32 %v78, %v206
    %v335 = vadd.f32 %v79, %v207
    %v336 = vadd.f32 %v80, %v208
    %v337 = vadd.f32 %v81, %v209
    %v338 = vadd.f32 %v82, %v210
    %v339 = vadd.f32 %v83, %v211
    %v340 = vadd.f32 %v84, %v212
    %v341 = vadd.f32 %v85, %v213
    %v342 = vadd.f32 %v86, %v214
    %v343 = vadd.f32 %v87, %v215
    %v344 = vadd.f32 %v88, %v216
    %v345 = vadd.f32 %v89, %v217
    %v346 = vadd.f32 %v90, %v218
    %v347 = vadd.f32 %v91, %v219
    %v348 = vadd.f32 %v92, %v220
    %v349 = vadd.f32 %v93, %v221
    %v350 = vadd.f32 %v94, %v222
    %v351 = vadd.f32 %v95, %v223
    %v352 = vadd.f32 %v96, %v224
    %v353 = vadd.f32 %v97, %v225
    %v354 = vadd.f32 %v98, %v226
    %v355 = vadd.f32 %v99, %v227
    %v356 = vadd.f32 %v100, %v228
    %v357 = vadd.f32 %v101, %v229
    %v358 = vadd.f32 %v102, %v230
    %v359 = vadd.f32 %v103, %v231
    %v360 = vadd.f32 %v104, %v232
    %v361 = vadd.f32 %v105, %v233
    %v362 = vadd.f32 %v106, %v234
    %v363 = vadd.f32 %v107, %v235
    %v364 = vadd.f32 %v108, %v236
    %v365 = vadd.f32 %v109, %v237
    %v366 = vadd.f32 %v110, %v238
    %v367 = vadd.f32 %v111, %v239
    %v368 = vadd.f32 %v112, %v240
    %v369 = vadd.f32 %v113, %v241
    %v370 = vadd.f32 %v114, %v242
    %v371 = vadd.f32 %v115, %v243
    %v372 = vadd.f32 %v116, %v244
    %v373 = vadd.f32 %v117, %v245
    %v374 = vadd.f32 %v118, %v246
    %v375 = vadd.f32 %v119, %v247
    %v376 = vadd.f32 %v120, %v248
    %v377 = vadd.f32 %v121, %v249
    %v378 = vadd.f32 %v122, %v250
    %v379 = vadd.f32 %v123, %v251
    %v380 = vadd.f32 %v124, %v252
    %v381 = vadd.f32 %v125, %v253
    %v382 = vadd.f32 %v126, %v254
    %v383 = vadd.f32 %v127, %v255
    %v384 = vadd.f32 %v128, %v256
    %v385 = vadd.f32 %v129, %v257
    %v386 = vadd.f32 %v130, %v258
    %v387 = vadd.f32 %v131, %v259
    %v388 = vadd.f32 %v132, %v260
    %v389 = vadd.f32 %v133, %v261
    %v390 = vadd.f32 %v134, %v262
    %v391 = vadd.f32 %v135, %v263
    %v392 = vadd.f32 %v136, %v264
    %v393 = vadd.f32 %v137, %v265
    %v394 = vadd.f32 %v138, %v266
    %v395 = vadd.f32 %v139, %v267
    %v396 = vadd.f32 %v140, %v268
    %v397 = vadd.f32 %v141, %v269
    %v398 = vadd.f32 %v142, %v270
    %v399 = vadd.f32 %v143, %v271
    %v400 = vadd.f32 %v144, %v272
    %v401 = vadd.f32 %v145, %v273
    %v402 = vadd.f32 %v146, %v274
    %v403 = vadd.f32 %v147, %v275
    %v404 = vadd.f32 %v148, %v276
    %v405 = vadd.f32 %v149, %v277
    %v406 = vadd.f32 %v150, %v278
    %v407 = vadd.f32 %v151, %v279
    %v408 = vadd.f32 %v152, %v280
    %v409 = vadd.f32 %v153, %v281
    %v410 = vadd.f32 %v154, %v282
    %v411 = vadd.f32 %v155, %v283
    %v412 = vadd.f32 %v156, %v284
    %v413 = vadd.f32 %v157, %v285
    %v414 = vadd.f32 %v158, %v286
    %v415 = vadd.f32 %v159, %v287
    %v416 = vadd.f32 %v160, %v288
    %v417 = vadd.f32 %v161, %v289
    %v418 = vadd.f32 %v162, %v290
    %v419 = vadd.f32 %v163, %v291
    %v420 = vadd.f32 %v164, %v292
    %v421 = vadd.f32 %v165, %v293
    %v422 = vadd.f32 %v166, %v294
    %v423 = vadd.f32 %v167, %v295
    %424 = vst [vmem:[#allocation7] sm:$0xff] %v296
    %425 = vst [vmem:[#allocation7 + $0x8] sm:$0xff] %v297
    %426 = vst [vmem:[#allocation7 + $0x10] sm:$0xff] %v298
    %427 = vst [vmem:[#allocation7 + $0x18] sm:$0xff] %v299
    %428 = vst [vmem:[#allocation7 + $0x20] sm:$0xff] %v300
    %429 = vst [vmem:[#allocation7 + $0x28] sm:$0xff] %v301
    %430 = vst [vmem:[#allocation7 + $0x30] sm:$0xff] %v302
    %431 = vst [vmem:[#allocation7 + $0x38] sm:$0xff] %v303
    %432 = vst [vmem:[#allocation7 + $0x40] sm:$0xff] %v304
    %433 = vst [vmem:[#allocation7 + $0x48] sm:$0xff] %v305
    %434 = vst [vmem:[#allocation7 + $0x50] sm:$0xff] %v306
    %435 = vst [vmem:[#allocation7 + $0x58] sm:$0xff] %v307
    %436 = vst [vmem:[#allocation7 + $0x60] sm:$0xff] %v308
    %437 = vst [vmem:[#allocation7 + $0x68] sm:$0xff] %v309
    %438 = vst [vmem:[#allocation7 + $0x70] sm:$0xff] %v310
    %439 = vst [vmem:[#allocation7 + $0x78] sm:$0xff] %v311
    %440 = vst [vmem:[#allocation7 + $0x80] sm:$0xff] %v312
    %441 = vst [vmem:[#allocation7 + $0x88] sm:$0xff] %v313
    %442 = vst [vmem:[#allocation7 + $0x90] sm:$0xff] %v314
    %443 = vst [vmem:[#allocation7 + $0x98] sm:$0xff] %v315
    %444 = vst [vmem:[#allocation7 + $0xa0] sm:$0xff] %v316
    %445 = vst [vmem:[#allocation7 + $0xa8] sm:$0xff] %v317
    %446 = vst [vmem:[#allocation7 + $0xb0] sm:$0xff] %v318
    %447 = vst [vmem:[#allocation7 + $0xb8] sm:$0xff] %v319
    %448 = vst [vmem:[#allocation7 + $0xc0] sm:$0xff] %v320
    %449 = vst [vmem:[#allocation7 + $0xc8] sm:$0xff] %v321
    %450 = vst [vmem:[#allocation7 + $0xd0] sm:$0xff] %v322
    %451 = vst [vmem:[#allocation7 + $0xd8] sm:$0xff] %v323
    %452 = vst [vmem:[#allocation7 + $0xe0] sm:$0xff] %v324
    %453 = vst [vmem:[#allocation7 + $0xe8] sm:$0xff] %v325
    %454 = vst [vmem:[#allocation7 + $0xf0] sm:$0xff] %v326
    %455 = vst [vmem:[#allocation7 + $0xf8] sm:$0xff] %v327
    %456 = vst [vmem:[#allocation7 + $0x100] sm:$0xff] %v328
    %457 = vst [vmem:[#allocation7 + $0x108] sm:$0xff] %v329
    %458 = vst [vmem:[#allocation7 + $0x110] sm:$0xff] %v330
    %459 = vst [vmem:[#allocation7 + $0x118] sm:$0xff] %v331
    %460 = vst [vmem:[#allocation7 + $0x120] sm:$0xff] %v332
    %461 = vst [vmem:[#allocation7 + $0x128] sm:$0xff] %v333
    %462 = vst [vmem:[#allocation7 + $0x130] sm:$0xff] %v334
    %463 = vst [vmem:[#allocation7 + $0x138] sm:$0xff] %v335
    %464 = vst [vmem:[#allocation7 + $0x140] sm:$0xff] %v336
    %465 = vst [vmem:[#allocation7 + $0x148] sm:$0xff] %v337
    %466 = vst [vmem:[#allocation7 + $0x150] sm:$0xff] %v338
    %467 = vst [vmem:[#allocation7 + $0x158] sm:$0xff] %v339
    %468 = vst [vmem:[#allocation7 + $0x160] sm:$0xff] %v340
    %469 = vst [vmem:[#allocation7 + $0x168] sm:$0xff] %v341
    %470 = vst [vmem:[#allocation7 + $0x170] sm:$0xff] %v342
    %471 = vst [vmem:[#allocation7 + $0x178] sm:$0xff] %v343
    %472 = vst [vmem:[#allocation7 + $0x180] sm:$0xff] %v344
    %473 = vst [vmem:[#allocation7 + $0x188] sm:$0xff] %v345
    %474 = vst [vmem:[#allocation7 + $0x190] sm:$0xff] %v346
    %475 = vst [vmem:[#allocation7 + $0x198] sm:$0xff] %v347
    %476 = vst [vmem:[#allocation7 + $0x1a0] sm:$0xff] %v348
    %477 = vst [vmem:[#allocation7 + $0x1a8] sm:$0xff] %v349
    %478 = vst [vmem:[#allocation7 + $0x1b0] sm:$0xff] %v350
    %479 = vst [vmem:[#allocation7 + $0x1b8] sm:$0xff] %v351
    %480 = vst [vmem:[#allocation7 + $0x1c0] sm:$0xff] %v352
    %481 = vst [vmem:[#allocation7 + $0x1c8] sm:$0xff] %v353
    %482 = vst [vmem:[#allocation7 + $0x1d0] sm:$0xff] %v354
    %483 = vst [vmem:[#allocation7 + $0x1d8] sm:$0xff] %v355
    %484 = vst [vmem:[#allocation7 + $0x1e0] sm:$0xff] %v356
    %485 = vst [vmem:[#allocation7 + $0x1e8] sm:$0xff] %v357
    %486 = vst [vmem:[#allocation7 + $0x1f0] sm:$0xff] %v358
    %487 = vst [vmem:[#allocation7 + $0x1f8] sm:$0xff] %v359
    %488 = vst [vmem:[#allocation7 + $0x200] sm:$0xff] %v360
    %489 = vst [vmem:[#allocation7 + $0x208] sm:$0xff] %v361
    %490 = vst [vmem:[#allocation7 + $0x210] sm:$0xff] %v362
    %491 = vst [vmem:[#allocation7 + $0x218] sm:$0xff] %v363
    %492 = vst [vmem:[#allocation7 + $0x220] sm:$0xff] %v364
    %493 = vst [vmem:[#allocation7 + $0x228] sm:$0xff] %v365
    %494 = vst [vmem:[#allocation7 + $0x230] sm:$0xff] %v366
    %495 = vst [vmem:[#allocation7 + $0x238] sm:$0xff] %v367
    %496 = vst [vmem:[#allocation7 + $0x240] sm:$0xff] %v368
    %497 = vst [vmem:[#allocation7 + $0x248] sm:$0xff] %v369
    %498 = vst [vmem:[#allocation7 + $0x250] sm:$0xff] %v370
    %499 = vst [vmem:[#allocation7 + $0x258] sm:$0xff] %v371
    %500 = vst [vmem:[#allocation7 + $0x260] sm:$0xff] %v372
    %501 = vst [vmem:[#allocation7 + $0x268] sm:$0xff] %v373
    %502 = vst [vmem:[#allocation7 + $0x270] sm:$0xff] %v374
    %503 = vst [vmem:[#allocation7 + $0x278] sm:$0xff] %v375
    %504 = vst [vmem:[#allocation7 + $0x280] sm:$0xff] %v376
    %505 = vst [vmem:[#allocation7 + $0x288] sm:$0xff] %v377
    %506 = vst [vmem:[#allocation7 + $0x290] sm:$0xff] %v378
    %507 = vst [vmem:[#allocation7 + $0x298] sm:$0xff] %v379
    %508 = vst [vmem:[#allocation7 + $0x2a0] sm:$0xff] %v380
    %509 = vst [vmem:[#allocation7 + $0x2a8] sm:$0xff] %v381
    %510 = vst [vmem:[#allocation7 + $0x2b0] sm:$0xff] %v382
    %511 = vst [vmem:[#allocation7 + $0x2b8] sm:$0xff] %v383
    %512 = vst [vmem:[#allocation7 + $0x2c0] sm:$0xff] %v384
    %513 = vst [vmem:[#allocation7 + $0x2c8] sm:$0xff] %v385
    %514 = vst [vmem:[#allocation7 + $0x2d0] sm:$0xff] %v386
    %515 = vst [vmem:[#allocation7 + $0x2d8] sm:$0xff] %v387
    %516 = vst [vmem:[#allocation7 + $0x2e0] sm:$0xff] %v388
    %517 = vst [vmem:[#allocation7 + $0x2e8] sm:$0xff] %v389
    %518 = vst [vmem:[#allocation7 + $0x2f0] sm:$0xff] %v390
    %519 = vst [vmem:[#allocation7 + $0x2f8] sm:$0xff] %v391
    %520 = vst [vmem:[#allocation7 + $0x300] sm:$0xff] %v392
    %521 = vst [vmem:[#allocation7 + $0x308] sm:$0xff] %v393
    %522 = vst [vmem:[#allocation7 + $0x310] sm:$0xff] %v394
    %523 = vst [vmem:[#allocation7 + $0x318] sm:$0xff] %v395
    %524 = vst [vmem:[#allocation7 + $0x320] sm:$0xff] %v396
    %525 = vst [vmem:[#allocation7 + $0x328] sm:$0xff] %v397
    %526 = vst [vmem:[#allocation7 + $0x330] sm:$0xff] %v398
    %527 = vst [vmem:[#allocation7 + $0x338] sm:$0xff] %v399
    %528 = vst [vmem:[#allocation7 + $0x340] sm:$0xff] %v400
    %529 = vst [vmem:[#allocation7 + $0x348] sm:$0xff] %v401
    %530 = vst [vmem:[#allocation7 + $0x350] sm:$0xff] %v402
    %531 = vst [vmem:[#allocation7 + $0x358] sm:$0xff] %v403
    %532 = vst [vmem:[#allocation7 + $0x360] sm:$0xff] %v404
    %533 = vst [vmem:[#allocation7 + $0x368] sm:$0xff] %v405
    %534 = vst [vmem:[#allocation7 + $0x370] sm:$0xff] %v406
    %535 = vst [vmem:[#allocation7 + $0x378] sm:$0xff] %v407
    %536 = vst [vmem:[#allocation7 + $0x380] sm:$0xff] %v408
    %537 = vst [vmem:[#allocation7 + $0x388] sm:$0xff] %v409
    %538 = vst [vmem:[#allocation7 + $0x390] sm:$0xff] %v410
    %539 = vst [vmem:[#allocation7 + $0x398] sm:$0xff] %v411
    %540 = vst [vmem:[#allocation7 + $0x3a0] sm:$0xff] %v412
    %541 = vst [vmem:[#allocation7 + $0x3a8] sm:$0xff] %v413
    %542 = vst [vmem:[#allocation7 + $0x3b0] sm:$0xff] %v414
    %543 = vst [vmem:[#allocation7 + $0x3b8] sm:$0xff] %v415
    %544 = vst [vmem:[#allocation7 + $0x3c0] sm:$0xff] %v416
    %545 = vst [vmem:[#allocation7 + $0x3c8] sm:$0xff] %v417
    %546 = vst [vmem:[#allocation7 + $0x3d0] sm:$0xff] %v418
    %547 = vst [vmem:[#allocation7 + $0x3d8] sm:$0xff] %v419
    %548 = vst [vmem:[#allocation7 + $0x3e0] sm:$0xff] %v420
    %549 = vst [vmem:[#allocation7 + $0x3e8] sm:$0xff] %v421
    %550 = vst [vmem:[#allocation7 + $0x3f0] sm:$0xff] %v422
    %551 = vst [vmem:[#allocation7 + $0x3f8] sm:$0xff] %v423
    // Predicated region
    $region18: #{tpu_custom_call.1} parent=1 // pred_check
      _
    $region19: #{tpu_custom_call.1} parent=1 // pred_check_branch
      %553 = sbr.rel (0) target = $region21
    $region20: #{tpu_custom_call.1} parent=1 // pred_region
      %s555 = ssub.s32 16384, 16384
      %556 = vsyncadd [#allocation4], %s555
      %s557 = sshll.u32 [#allocation7], 4
      %s558 = int_to_ptr.vmem [resolvable:$true] %s557
      %563 = dma.vmem_to_hbm [thread:$0]  %s558, 16384, %s2, [#allocation4], 4096, 4096, 256
    $region21: #{tpu_custom_call.1} parent=1 // pred_fallthru
      _
    // Predicated region
    $region22: #{tpu_custom_call.1} parent=1 // pred_check
      _
    $region23: #{tpu_custom_call.1} parent=1 // pred_check_branch
      %565 = sbr.rel (0) target = $region25
    $region24: #{tpu_custom_call.1} parent=1 // pred_region
      %566 = dma.done [#allocation4], 16384
    $region25: #{tpu_custom_call.1} parent=1 // pred_fallthru
      _
    %567 = vsyncpa [#allocation3], 1
    %568 = vsyncpa [#allocation6], 1
    %569 = vsyncpa [#allocation4], 1

</llo_original>
